<compile_context>
chip_gen: v6e
topology: v6e:2x2x1
jax: 0.10.0
libtpu: 0.0.40
codegen_flags: <defaults>
</compile_context>

<pallas_src>
import jax
import jax.numpy as jnp
from jax.experimental import pallas as pl
from jax.experimental.pallas import tpu as pltpu

IN_FEATURES = 28 * 28          # 784
HIDDEN = 128
OUT_FEATURES = 10
OUT_PAD = 128                  # lane-dense padded output width


def _round_up(x, m):
    return (x + m - 1) // m * m


def mlp_kernel(x_ref, w1_ref, b1_ref, w2_ref, b2_ref, o_ref):
    # x_ref : (TB, 784) f32      w1_ref: (784, 128) bf16   b1_ref: (1, 128) f32
    # w2_ref: (128, 128) bf16    b2_ref: (1, 128) f32      o_ref : (TB, 128) f32
    x_bf16 = x_ref[...].astype(jnp.bfloat16)          # VPU cast in VMEM, hides under DMA/MXU
    h = jnp.dot(x_bf16, w1_ref[...], preferred_element_type=jnp.float32)
    h = jnp.maximum(h + b1_ref[...], 0.0)             # bias + ReLU in f32 on the VPU
    o = jnp.dot(h.astype(jnp.bfloat16), w2_ref[...],
                preferred_element_type=jnp.float32)
    o_ref[...] = o + b2_ref[...]


def prepare_params(w1, b1, w2, b2):
    """One-time weight prep (bf16 cast + lane-dense head padding).

    Hoisted out of the per-call forward path so each call only pays for the
    pallas_call itself plus the cheap (B, 10) logits slice.
    """
    w1b = jnp.asarray(w1, jnp.bfloat16)
    b1r = jnp.asarray(b1, jnp.float32).reshape(1, HIDDEN)
    w2p = jnp.zeros((HIDDEN, OUT_PAD), jnp.bfloat16).at[:, :OUT_FEATURES].set(
        jnp.asarray(w2, jnp.bfloat16))
    b2p = jnp.zeros((1, OUT_PAD), jnp.float32).at[:, :OUT_FEATURES].set(
        jnp.asarray(b2, jnp.float32).reshape(1, OUT_FEATURES))
    return w1b, b1r, w2p, b2p


@jax.jit
def base_model_forward(x_nchw, w1b, b1r, w2p, b2p):
    B = x_nchw.shape[0]
    # Flatten like torch's x.view(B, -1). Kept in f32: the kernel casts to bf16
    # in VMEM, so x crosses HBM exactly once (no separate cast pass).
    x2d = x_nchw.reshape(B, -1)

    # Batch tiling:
    #  - small B: one tile covering the whole batch (block dims == array dims).
    #  - large B: tiles up to 1024 rows (multiple of 128) to amortize per-step
    #    overhead, capped so the grid has >= 2 steps for v7x's 2 TensorCores.
    # Ragged B is handled by Pallas block masking -- no wrapper-side pad.
    if B <= 256:
        TB = B
    else:
        TB = max(128, min(1024, _round_up(pl.cdiv(B, 2), 128)))
    grid = (pl.cdiv(B, TB),)

    cost = pl.CostEstimate(
        flops=2 * B * IN_FEATURES * HIDDEN + 2 * B * HIDDEN * OUT_PAD,
        transcendentals=0,
        bytes_accessed=(B * IN_FEATURES * 4          # x (f32, single pass)
                        + IN_FEATURES * HIDDEN * 2   # w1 (bf16, resident)
                        + HIDDEN * OUT_PAD * 2       # w2 (bf16, resident)
                        + (HIDDEN + OUT_PAD) * 4     # biases (f32)
                        + B * OUT_PAD * 4),          # out (f32)
    )

    out = pl.pallas_call(
        mlp_kernel,
        out_shape=jax.ShapeDtypeStruct((B, OUT_PAD), jnp.float32),
        grid_spec=pltpu.PrefetchScalarGridSpec(
            num_scalar_prefetch=0,
            grid=grid,
            in_specs=[
                pl.BlockSpec((TB, IN_FEATURES), lambda i: (i, 0)),       # x streams
                pl.BlockSpec((IN_FEATURES, HIDDEN), lambda i: (0, 0)),   # w1 resident
                pl.BlockSpec((1, HIDDEN), lambda i: (0, 0)),             # b1 resident
                pl.BlockSpec((HIDDEN, OUT_PAD), lambda i: (0, 0)),       # w2 resident
                pl.BlockSpec((1, OUT_PAD), lambda i: (0, 0)),            # b2 resident
            ],
            out_specs=pl.BlockSpec((TB, OUT_PAD), lambda i: (i, 0)),
        ),
        compiler_params=pltpu.CompilerParams(
            dimension_semantics=("parallel",),       # shard batch tiles across TCs (v7x)
            vmem_limit_bytes=32 * 1024 * 1024,       # TB=1024 f32 x tile dbl-buffered ~= 8 MiB
        ),
        cost_estimate=cost,
    )(x2d, w1b, b1r, w2p, b2p)

    # Narrow logits view (B, 10); kernel output stays lane-dense for unmasked vst.
    return out[:, :OUT_FEATURES]


def init_params(key):
    # Deterministic init mimicking nn.Linear default: U(-1/sqrt(fan_in), 1/sqrt(fan_in))
    k1, k2, k3, k4 = jax.random.split(key, 4)
    lim1 = 1.0 / jnp.sqrt(jnp.float32(IN_FEATURES))
    lim2 = 1.0 / jnp.sqrt(jnp.float32(HIDDEN))
    w1 = jax.random.uniform(k1, (IN_FEATURES, HIDDEN), jnp.float32, -lim1, lim1)
    b1 = jax.random.uniform(k2, (HIDDEN,), jnp.float32, -lim1, lim1)
    w2 = jax.random.uniform(k3, (HIDDEN, OUT_FEATURES), jnp.float32, -lim2, lim2)
    b2 = jax.random.uniform(k4, (OUT_FEATURES,), jnp.float32, -lim2, lim2)
    return w1, b1, w2, b2


if __name__ == "__main__":
    key = jax.random.PRNGKey(0)
    pkey, xkey, xkey2 = jax.random.split(key, 3)
    w1, b1, w2, b2 = init_params(pkey)
    params = prepare_params(w1, b1, w2, b2)

    def ref_bf16(x):
        # Same precision recipe as the kernel (bf16 streams, f32 accumulate)
        xb = x.reshape(x.shape[0], -1).astype(jnp.bfloat16)
        h = jnp.dot(xb, w1.astype(jnp.bfloat16),
                    preferred_element_type=jnp.float32) + b1
        h = jnp.maximum(h, 0.0)
        return jnp.dot(h.astype(jnp.bfloat16), w2.astype(jnp.bfloat16),
                       preferred_element_type=jnp.float32) + b2

    # Small MNIST-shaped batch: (B, 1, 28, 28) NCHW
    B = 2
    x = jax.random.normal(xkey, (B, 1, 28, 28), jnp.float32)
    out = jax.block_until_ready(base_model_forward(x, *params))
    assert out.shape == (B, OUT_FEATURES)
    assert jnp.allclose(out, ref_bf16(x), atol=2e-3, rtol=2e-3), (
        f"max abs err {jnp.max(jnp.abs(out - ref_bf16(x)))}")
    ref_f32 = jnp.maximum(x.reshape(B, -1) @ w1 + b1, 0.0) @ w2 + b2
    assert jnp.allclose(out, ref_f32, atol=5e-2, rtol=5e-2)

    # Ragged multi-tile batch: exercises the cdiv grid, masked last block, and
    # the >=2-step parallel axis (v7x megacore path).
    B2 = 300
    x2 = jax.random.normal(xkey2, (B2, 1, 28, 28), jnp.float32)
    out2 = jax.block_until_ready(base_model_forward(x2, *params))
    assert out2.shape == (B2, OUT_FEATURES)
    assert jnp.allclose(out2, ref_bf16(x2), atol=2e-3, rtol=2e-3), (
        f"max abs err {jnp.max(jnp.abs(out2 - ref_bf16(x2)))}")

    print("KERNEL_OK")
</pallas_src>

<mosaic_0001>
module attributes {stable_mosaic.version = 11 : i64} {
  func.func @mlp_kernel(%arg0: i32, %arg1: memref<2x784xf32, #tpu.memory_space<vmem>>, %arg2: memref<784x128xbf16, #tpu.memory_space<vmem>>, %arg3: memref<1x128xf32, #tpu.memory_space<vmem>>, %arg4: memref<128x128xbf16, #tpu.memory_space<vmem>>, %arg5: memref<1x128xf32, #tpu.memory_space<vmem>>, %arg6: memref<2x128xf32, #tpu.memory_space<vmem>>) attributes {dimension_semantics = [#tpu.dimension_semantics<parallel>], iteration_bounds = array<i64: 1>, scalar_prefetch = 0 : i64, scratch_operands = 0 : i64, tpu.core_type = #tpu.core_type<tc>, window_params = [{transform_indices = @transform_0, window_bounds = array<i64: 2, 784>}, {pipeline_mode = #tpu.pipeline_mode<synchronous>, transform_indices = @transform_1, window_bounds = array<i64: 784, 128>}, {pipeline_mode = #tpu.pipeline_mode<synchronous>, transform_indices = @transform_2, window_bounds = array<i64: 1, 128>}, {pipeline_mode = #tpu.pipeline_mode<synchronous>, transform_indices = @transform_3, window_bounds = array<i64: 128, 128>}, {pipeline_mode = #tpu.pipeline_mode<synchronous>, transform_indices = @transform_4, window_bounds = array<i64: 1, 128>}, {transform_indices = @transform_5, window_bounds = array<i64: 2, 128>}]} {
    %c0 = arith.constant 0 : index
    %c0_0 = arith.constant 0 : index
    %0 = vector.load %arg1[%c0, %c0_0] : memref<2x784xf32, #tpu.memory_space<vmem>>, vector<2x784xf32>
    %1 = arith.truncf %0 : vector<2x784xf32> to vector<2x784xbf16>
    %c0_1 = arith.constant 0 : index
    %c0_2 = arith.constant 0 : index
    %2 = vector.load %arg2[%c0_1, %c0_2] : memref<784x128xbf16, #tpu.memory_space<vmem>>, vector<784x128xbf16>
    %cst = arith.constant dense<0.000000e+00> : vector<2x128xf32>
    %3 = tpu.matmul %1, %2, %cst {dimension_numbers = #tpu.dot_dimension_numbers<[1], [0], [0], [1], [0, 0, 1, 1], [], []>} : vector<2x784xbf16>, vector<784x128xbf16>, vector<2x128xf32> -> vector<2x128xf32>
    %c0_3 = arith.constant 0 : index
    %c0_4 = arith.constant 0 : index
    %4 = vector.load %arg3[%c0_3, %c0_4] : memref<1x128xf32, #tpu.memory_space<vmem>>, vector<1x128xf32>
    %5 = vector.broadcast %4 : vector<1x128xf32> to vector<2x128xf32>
    %6 = arith.addf %3, %5 : vector<2x128xf32>
    %cst_5 = arith.constant 0.000000e+00 : f32
    %7 = vector.broadcast %cst_5 : f32 to vector<2x128xf32>
    %8 = arith.maximumf %6, %7 : vector<2x128xf32>
    %9 = arith.truncf %8 : vector<2x128xf32> to vector<2x128xbf16>
    %c0_6 = arith.constant 0 : index
    %c0_7 = arith.constant 0 : index
    %10 = vector.load %arg4[%c0_6, %c0_7] : memref<128x128xbf16, #tpu.memory_space<vmem>>, vector<128x128xbf16>
    %cst_8 = arith.constant dense<0.000000e+00> : vector<2x128xf32>
    %11 = tpu.matmul %9, %10, %cst_8 {dimension_numbers = #tpu.dot_dimension_numbers<[1], [0], [0], [1], [0, 0, 1, 1], [], []>} : vector<2x128xbf16>, vector<128x128xbf16>, vector<2x128xf32> -> vector<2x128xf32>
    %c0_9 = arith.constant 0 : index
    %c0_10 = arith.constant 0 : index
    %12 = vector.load %arg5[%c0_9, %c0_10] : memref<1x128xf32, #tpu.memory_space<vmem>>, vector<1x128xf32>
    %13 = vector.broadcast %12 : vector<1x128xf32> to vector<2x128xf32>
    %14 = arith.addf %11, %13 : vector<2x128xf32>
    %c0_11 = arith.constant 0 : index
    %c0_12 = arith.constant 0 : index
    %15 = vector.load %arg6[%c0_11, %c0_12] : memref<2x128xf32, #tpu.memory_space<vmem>>, vector<2x128xf32>
    tpu.vector_store %arg6[%c0_11, %c0_12], %14 {strides = array<i32>} : memref<2x128xf32, #tpu.memory_space<vmem>>, vector<2x128xf32>,
    return
  }
  func.func @transform_0(%arg0: i32) -> (i32, i32) {
    %c0_i32 = arith.constant 0 : i32
    %c0_i32_0 = arith.constant 0 : i32
    return %arg0, %c0_i32 : i32, i32
  }
  func.func @transform_1(%arg0: i32) -> (i32, i32) {
    %c0_i32 = arith.constant 0 : i32
    %c0_i32_0 = arith.constant 0 : i32
    %c0_i32_1 = arith.constant 0 : i32
    return %c0_i32, %c0_i32_0 : i32, i32
  }
  func.func @transform_2(%arg0: i32) -> (i32, i32) {
    %c0_i32 = arith.constant 0 : i32
    %c0_i32_0 = arith.constant 0 : i32
    %c0_i32_1 = arith.constant 0 : i32
    return %c0_i32, %c0_i32_0 : i32, i32
  }
  func.func @transform_3(%arg0: i32) -> (i32, i32) {
    %c0_i32 = arith.constant 0 : i32
    %c0_i32_0 = arith.constant 0 : i32
    %c0_i32_1 = arith.constant 0 : i32
    return %c0_i32, %c0_i32_0 : i32, i32
  }
  func.func @transform_4(%arg0: i32) -> (i32, i32) {
    %c0_i32 = arith.constant 0 : i32
    %c0_i32_0 = arith.constant 0 : i32
    %c0_i32_1 = arith.constant 0 : i32
    return %c0_i32, %c0_i32_0 : i32, i32
  }
  func.func @transform_5(%arg0: i32) -> (i32, i32) {
    %c0_i32 = arith.constant 0 : i32
    %c0_i32_0 = arith.constant 0 : i32
    return %arg0, %c0_i32 : i32, i32
  }
}

</mosaic_0001>

<llo_original>
// kernel: base_model_forward.1
$region0: #{base_model_forward.1}
  #allocation0 [shape = 'u32[]', space=smem, size = 0x4, offset = 0x4, fixed_abs, tag = 'smem constant byte address 0x4 - core index']
  #allocation1 [shape = 'u32[144,128]{1,0:T(1,128)}', space=vmem, size = 0x12000, scoped, tag = 'internal scratch']
  %s0 = inlined_call_operand.vmem [shape: f32[2,784], index: 0, kind: input, shape index: {}]
  %s1 = inlined_call_operand.hbm [shape: bf16[784,128], index: 1, kind: input, shape index: {}]
  %s2 = inlined_call_operand.vmem [shape: f32[1,128], index: 2, kind: input, shape index: {}]
  %s3 = inlined_call_operand.vmem [shape: bf16[128,128], index: 3, kind: input, shape index: {}]
  %s4 = inlined_call_operand.vmem [shape: f32[1,128], index: 4, kind: input, shape index: {}]
  %s5 = inlined_call_operand.hbm [shape: f32[2,128], index: 5, kind: output, shape index: {}]
  %s6 = sld [smem:[#allocation0]]
  $region34: #{base_model_forward.1} parent=0
    _
  %s8 = ssub.s32 1, %s6
  %s9 = scalar_select 0, %s8, %s6
  $region1: #{base_model_forward.1} parent=0
    #allocation2 [shape = 'u8[200704]{0}', space=vmem, size = 0x31000, scoped, tag = 'input window, operand 1, single buffered']
    #allocation3 [shape = 's32[1]{0}', space=sflag, size = 0x4, scoped, tag = 'scoped memory for base_model_forward.1']
    #allocation4 [shape = 's32[1]{0}', space=sflag, size = 0x4, scoped, tag = 'scoped memory for base_model_forward.1']
    #allocation5 [shape = 'u8[1024]{0}', space=vmem, size = 0x400, scoped, tag = 'output window, operand 0, single buffered']
    %10 = vsyncpa [#allocation3], 0
    %11 = vsyncpa [#allocation4], 0
    // Predicated region
    $region2: #{base_model_forward.1} parent=1 // pred_check
      _
    $region3: #{base_model_forward.1} parent=1 // pred_check_branch
      %13 = sbr.rel (0) target = $region5
    $region4: #{base_model_forward.1} parent=1 // pred_region
      _
    $region5: #{base_model_forward.1} parent=1 // pred_fallthru
      _
    // Predicated region
    $region6: #{base_model_forward.1} parent=1 // pred_check
      _
    $region7: #{base_model_forward.1} parent=1 // pred_check_branch
      %15 = sbr.rel (0) target = $region9
    $region8: #{base_model_forward.1} parent=1 // pred_region
      %s17 = ssub.s32 6272, 6272
      %18 = vsyncadd [#allocation3], %s17
      %s19 = sshll.u32 [#allocation2], 4
      %s20 = int_to_ptr.vmem [resolvable:$true] %s19
      %25 = dma.hbm_to_vmem [thread:$0]  %s1, 6272, %s20, [#allocation3], 64, 64, 4
    $region9: #{base_model_forward.1} parent=1 // pred_fallthru
      _
    // Predicated region
    $region10: #{base_model_forward.1} parent=1 // pred_check
      _
    $region11: #{base_model_forward.1} parent=1 // pred_check_branch
      %27 = sbr.rel (0) target = $region13
    $region12: #{base_model_forward.1} parent=1 // pred_region
      _
    $region13: #{base_model_forward.1} parent=1 // pred_fallthru
      _
    // Predicated region
    $region14: #{base_model_forward.1} parent=1 // pred_check
      _
    $region15: #{base_model_forward.1} parent=1 // pred_check_branch
      %29 = sbr.rel (0) target = $region17
    $region16: #{base_model_forward.1} parent=1 // pred_region
      _
    $region17: #{base_model_forward.1} parent=1 // pred_fallthru
      _
    // Predicated region
    $region18: #{base_model_forward.1} parent=1 // pred_check
      _
    $region19: #{base_model_forward.1} parent=1 // pred_check_branch
      %31 = sbr.rel (0) target = $region21
    $region20: #{base_model_forward.1} parent=1 // pred_region
      _
    $region21: #{base_model_forward.1} parent=1 // pred_fallthru
      _
    // Predicated region
    $region22: #{base_model_forward.1} parent=1 // pred_check
      _
    $region23: #{base_model_forward.1} parent=1 // pred_check_branch
      %33 = sbr.rel (0) target = $region25
    $region24: #{base_model_forward.1} parent=1 // pred_region
      %34 = dma.done [#allocation3], 6272
    $region25: #{base_model_forward.1} parent=1 // pred_fallthru
      _
    %v36 = vld [vmem:[%s0] sm:$0xff]
    %v37 = vld [vmem:[%s0 + $0x8] sm:$0x3f]
    %v40 = vcombine.high %v36, %v36
    %v42 = vunpack.c.l.s4 1983009808
    %v43 = vunpack.c.0.s8 %v42
    %v44 = vlaneseq
    %v45 = vshrl.u32 %v44, 7
    %v46 = vsub.s32 %v43, %v45
    %v47 = vrot.slane %v36, %v46
    %v49 = vunpack.c.l.s4 1983009808
    %v50 = vunpack.c.0.s8 %v49
    %v51 = vlaneseq
    %v52 = vshrl.u32 %v51, 7
    %v53 = vsub.s32 %v50, %v52
    %v54 = vrot.slane %v40, %v53
    %v55 = vcombine.high %v47, %v47
    %v56 = vcombine.high %v54, %v54
    %v57 = vcombine.high %v37, %v37
    %v59 = vunpack.c.l.s4 1983009808
    %v60 = vunpack.c.0.s8 %v59
    %v61 = vlaneseq
    %v62 = vshrl.u32 %v61, 7
    %v63 = vsub.s32 %v60, %v62
    %v64 = vrot.slane %v37, %v63
    %v66 = vunpack.c.l.s4 1983009808
    %v67 = vunpack.c.0.s8 %v66
    %v68 = vlaneseq
    %v69 = vshrl.u32 %v68, 7
    %v70 = vsub.s32 %v67, %v69
    %v71 = vrot.slane %v57, %v70
    %v72 = vcombine.high %v64, %v64
    %v80 = vpack.c.bf16 %v47, %v47
    %v81 = vpack.c.bf16 %v55, %v55
    %v82 = vpack.c.bf16 %v54, %v54
    %v83 = vpack.c.bf16 %v56, %v56
    %v84 = vpack.c.bf16 %v64, %v64
    %v85 = vpack.c.bf16 %v72, %v72
    %v86 = vpack.c.bf16 %v71, %v71
    %v87 = vld [vmem:[#allocation2] sm:$0xf]
    %v88 = vld [vmem:[#allocation2 + $0x4] sm:$0xf]
    %v89 = vld [vmem:[#allocation2 + $0x8] sm:$0xf]
    %v90 = vld [vmem:[#allocation2 + $0xc] sm:$0xf]
    %v91 = vld [vmem:[#allocation2 + $0x10] sm:$0xf]
    %v92 = vld [vmem:[#allocation2 + $0x14] sm:$0xf]
    %v93 = vld [vmem:[#allocation2 + $0x18] sm:$0xf]
    %v94 = vld [vmem:[#allocation2 + $0x1c] sm:$0xf]
    %v95 = vld [vmem:[#allocation2 + $0x20] sm:$0xf]
    %v96 = vld [vmem:[#allocation2 + $0x24] sm:$0xf]
    %v97 = vld [vmem:[#allocation2 + $0x28] sm:$0xf]
    %v98 = vld [vmem:[#allocation2 + $0x2c] sm:$0xf]
    %v99 = vld [vmem:[#allocation2 + $0x30] sm:$0xf]
    %v100 = vld [vmem:[#allocation2 + $0x34] sm:$0xf]
    %v101 = vld [vmem:[#allocation2 + $0x38] sm:$0xf]
    %v102 = vld [vmem:[#allocation2 + $0x3c] sm:$0xf]
    %v103 = vld [vmem:[#allocation2 + $0x40] sm:$0xf]
    %v104 = vld [vmem:[#allocation2 + $0x44] sm:$0xf]
    %v105 = vld [vmem:[#allocation2 + $0x48] sm:$0xf]
    %v106 = vld [vmem:[#allocation2 + $0x4c] sm:$0xf]
    %v107 = vld [vmem:[#allocation2 + $0x50] sm:$0xf]
    %v108 = vld [vmem:[#allocation2 + $0x54] sm:$0xf]
    %v109 = vld [vmem:[#allocation2 + $0x58] sm:$0xf]
    %v110 = vld [vmem:[#allocation2 + $0x5c] sm:$0xf]
    %v111 = vld [vmem:[#allocation2 + $0x60] sm:$0xf]
    %v112 = vld [vmem:[#allocation2 + $0x64] sm:$0xf]
    %v113 = vld [vmem:[#allocation2 + $0x68] sm:$0xf]
    %v114 = vld [vmem:[#allocation2 + $0x6c] sm:$0xf]
    %v115 = vld [vmem:[#allocation2 + $0x70] sm:$0xf]
    %v116 = vld [vmem:[#allocation2 + $0x74] sm:$0xf]
    %v117 = vld [vmem:[#allocation2 + $0x78] sm:$0xf]
    %v118 = vld [vmem:[#allocation2 + $0x7c] sm:$0xf]
    %v119 = vld [vmem:[#allocation2 + $0x80] sm:$0xf]
    %v120 = vld [vmem:[#allocation2 + $0x84] sm:$0xf]
    %v121 = vld [vmem:[#allocation2 + $0x88] sm:$0xf]
    %v122 = vld [vmem:[#allocation2 + $0x8c] sm:$0xf]
    %v123 = vld [vmem:[#allocation2 + $0x90] sm:$0xf]
    %v124 = vld [vmem:[#allocation2 + $0x94] sm:$0xf]
    %v125 = vld [vmem:[#allocation2 + $0x98] sm:$0xf]
    %v126 = vld [vmem:[#allocation2 + $0x9c] sm:$0xf]
    %v127 = vld [vmem:[#allocation2 + $0xa0] sm:$0xf]
    %v128 = vld [vmem:[#allocation2 + $0xa4] sm:$0xf]
    %v129 = vld [vmem:[#allocation2 + $0xa8] sm:$0xf]
    %v130 = vld [vmem:[#allocation2 + $0xac] sm:$0xf]
    %v131 = vld [vmem:[#allocation2 + $0xb0] sm:$0xf]
    %v132 = vld [vmem:[#allocation2 + $0xb4] sm:$0xf]
    %v133 = vld [vmem:[#allocation2 + $0xb8] sm:$0xf]
    %v134 = vld [vmem:[#allocation2 + $0xbc] sm:$0xf]
    %v135 = vld [vmem:[#allocation2 + $0xc0] sm:$0xf]
    %v136 = vld [vmem:[#allocation2 + $0xc4] sm:$0xf]
    %v137 = vld [vmem:[#allocation2 + $0xc8] sm:$0xf]
    %v138 = vld [vmem:[#allocation2 + $0xcc] sm:$0xf]
    %v139 = vld [vmem:[#allocation2 + $0xd0] sm:$0xf]
    %v140 = vld [vmem:[#allocation2 + $0xd4] sm:$0xf]
    %v141 = vld [vmem:[#allocation2 + $0xd8] sm:$0xf]
    %v142 = vld [vmem:[#allocation2 + $0xdc] sm:$0xf]
    %v143 = vld [vmem:[#allocation2 + $0xe0] sm:$0xf]
    %v144 = vld [vmem:[#allocation2 + $0xe4] sm:$0xf]
    %v145 = vld [vmem:[#allocation2 + $0xe8] sm:$0xf]
    %v146 = vld [vmem:[#allocation2 + $0xec] sm:$0xf]
    %v147 = vld [vmem:[#allocation2 + $0xf0] sm:$0xf]
    %v148 = vld [vmem:[#allocation2 + $0xf4] sm:$0xf]
    %v149 = vld [vmem:[#allocation2 + $0xf8] sm:$0xf]
    %v150 = vld [vmem:[#allocation2 + $0xfc] sm:$0xf]
    %v151 = vld [vmem:[#allocation2 + $0x100] sm:$0xf]
    %v152 = vld [vmem:[#allocation2 + $0x104] sm:$0xf]
    %v153 = vld [vmem:[#allocation2 + $0x108] sm:$0xf]
    %v154 = vld [vmem:[#allocation2 + $0x10c] sm:$0xf]
    %v155 = vld [vmem:[#allocation2 + $0x110] sm:$0xf]
    %v156 = vld [vmem:[#allocation2 + $0x114] sm:$0xf]
    %v157 = vld [vmem:[#allocation2 + $0x118] sm:$0xf]
    %v158 = vld [vmem:[#allocation2 + $0x11c] sm:$0xf]
    %v159 = vld [vmem:[#allocation2 + $0x120] sm:$0xf]
    %v160 = vld [vmem:[#allocation2 + $0x124] sm:$0xf]
    %v161 = vld [vmem:[#allocation2 + $0x128] sm:$0xf]
    %v162 = vld [vmem:[#allocation2 + $0x12c] sm:$0xf]
    %v163 = vld [vmem:[#allocation2 + $0x130] sm:$0xf]
    %v164 = vld [vmem:[#allocation2 + $0x134] sm:$0xf]
    %v165 = vld [vmem:[#allocation2 + $0x138] sm:$0xf]
    %v166 = vld [vmem:[#allocation2 + $0x13c] sm:$0xf]
    %v167 = vld [vmem:[#allocation2 + $0x140] sm:$0xf]
    %v168 = vld [vmem:[#allocation2 + $0x144] sm:$0xf]
    %v169 = vld [vmem:[#allocation2 + $0x148] sm:$0xf]
    %v170 = vld [vmem:[#allocation2 + $0x14c] sm:$0xf]
    %v171 = vld [vmem:[#allocation2 + $0x150] sm:$0xf]
    %v172 = vld [vmem:[#allocation2 + $0x154] sm:$0xf]
    %v173 = vld [vmem:[#allocation2 + $0x158] sm:$0xf]
    %v174 = vld [vmem:[#allocation2 + $0x15c] sm:$0xf]
    %v175 = vld [vmem:[#allocation2 + $0x160] sm:$0xf]
    %v176 = vld [vmem:[#allocation2 + $0x164] sm:$0xf]
    %v177 = vld [vmem:[#allocation2 + $0x168] sm:$0xf]
    %v178 = vld [vmem:[#allocation2 + $0x16c] sm:$0xf]
    %v179 = vld [vmem:[#allocation2 + $0x170] sm:$0xf]
    %v180 = vld [vmem:[#allocation2 + $0x174] sm:$0xf]
    %v181 = vld [vmem:[#allocation2 + $0x178] sm:$0xf]
    %v182 = vld [vmem:[#allocation2 + $0x17c] sm:$0xf]
    %v183 = vld [vmem:[#allocation2 + $0x180] sm:$0xf]
    %v184 = vld [vmem:[#allocation2 + $0x184] sm:$0xf]
    %v185 = vld [vmem:[%s2] sm:$0x1]
    %v187 = vlaneseq
    %v188 = vshrl.u32 %v187, 7
    %v189 = vsub.s32 0, %v188
    %v190 = vrot.slane %v185, %v189
    %v290 = vunpack.c.l.b16 %v87
    %v291 = vunpack.c.l.b16 %v88
    %v292 = vunpack.c.l.b16 %v89
    %v293 = vunpack.c.l.b16 %v90
    %v294 = vunpack.c.l.b16 %v91
    %v295 = vunpack.c.l.b16 %v92
    %v296 = vunpack.c.l.b16 %v93
    %v297 = vunpack.c.l.b16 %v94
    %v298 = vunpack.c.l.b16 %v95
    %v299 = vunpack.c.l.b16 %v96
    %v300 = vunpack.c.l.b16 %v97
    %v301 = vunpack.c.l.b16 %v98
    %v302 = vunpack.c.l.b16 %v99
    %v303 = vunpack.c.l.b16 %v100
    %v304 = vunpack.c.l.b16 %v101
    %v305 = vunpack.c.l.b16 %v102
    %v306 = vunpack.c.l.b16 %v103
    %v307 = vunpack.c.l.b16 %v104
    %v308 = vunpack.c.l.b16 %v105
    %v309 = vunpack.c.l.b16 %v106
    %v310 = vunpack.c.l.b16 %v107
    %v311 = vunpack.c.l.b16 %v108
    %v312 = vunpack.c.l.b16 %v109
    %v313 = vunpack.c.l.b16 %v110
    %v314 = vunpack.c.l.b16 %v111
    %v315 = vunpack.c.l.b16 %v112
    %v316 = vunpack.c.l.b16 %v113
    %v317 = vunpack.c.l.b16 %v114
    %v318 = vunpack.c.l.b16 %v115
    %v319 = vunpack.c.l.b16 %v116
    %v320 = vunpack.c.l.b16 %v117
    %v321 = vunpack.c.l.b16 %v118
    %v322 = vunpack.c.l.b16 %v119
    %v323 = vunpack.c.l.b16 %v120
    %v324 = vunpack.c.l.b16 %v121
    %v325 = vunpack.c.l.b16 %v122
    %v326 = vunpack.c.l.b16 %v123
    %v327 = vunpack.c.l.b16 %v124
    %v328 = vunpack.c.l.b16 %v125
    %v329 = vunpack.c.l.b16 %v126
    %v330 = vunpack.c.l.b16 %v127
    %v331 = vunpack.c.l.b16 %v128
    %v332 = vunpack.c.l.b16 %v129
    %v333 = vunpack.c.l.b16 %v130
    %v334 = vunpack.c.l.b16 %v131
    %v335 = vunpack.c.l.b16 %v132
    %v336 = vunpack.c.l.b16 %v133
    %v337 = vunpack.c.l.b16 %v134
    %v338 = vunpack.c.l.b16 %v135
    %v339 = vunpack.c.l.b16 %v136
    %v340 = vunpack.c.l.b16 %v137
    %v341 = vunpack.c.l.b16 %v138
    %v342 = vunpack.c.l.b16 %v139
    %v343 = vunpack.c.l.b16 %v140
    %v344 = vunpack.c.l.b16 %v141
    %v345 = vunpack.c.l.b16 %v142
    %v346 = vunpack.c.l.b16 %v143
    %v347 = vunpack.c.l.b16 %v144
    %v348 = vunpack.c.l.b16 %v145
    %v349 = vunpack.c.l.b16 %v146
    %v350 = vunpack.c.l.b16 %v147
    %v351 = vunpack.c.l.b16 %v148
    %v352 = vunpack.c.l.b16 %v149
    %v353 = vunpack.c.l.b16 %v150
    %v354 = vunpack.c.l.b16 %v151
    %v355 = vunpack.c.l.b16 %v152
    %v356 = vunpack.c.l.b16 %v153
    %v357 = vunpack.c.l.b16 %v154
    %v358 = vunpack.c.l.b16 %v155
    %v359 = vunpack.c.l.b16 %v156
    %v360 = vunpack.c.l.b16 %v157
    %v361 = vunpack.c.l.b16 %v158
    %v362 = vunpack.c.l.b16 %v159
    %v363 = vunpack.c.l.b16 %v160
    %v364 = vunpack.c.l.b16 %v161
    %v365 = vunpack.c.l.b16 %v162
    %v366 = vunpack.c.l.b16 %v163
    %v367 = vunpack.c.l.b16 %v164
    %v368 = vunpack.c.l.b16 %v165
    %v369 = vunpack.c.l.b16 %v166
    %v370 = vunpack.c.l.b16 %v167
    %v371 = vunpack.c.l.b16 %v168
    %v372 = vunpack.c.l.b16 %v169
    %v373 = vunpack.c.l.b16 %v170
    %v374 = vunpack.c.l.b16 %v171
    %v375 = vunpack.c.l.b16 %v172
    %v376 = vunpack.c.l.b16 %v173
    %v377 = vunpack.c.l.b16 %v174
    %v378 = vunpack.c.l.b16 %v175
    %v379 = vunpack.c.l.b16 %v176
    %v380 = vunpack.c.l.b16 %v177
    %v381 = vunpack.c.l.b16 %v178
    %v382 = vunpack.c.l.b16 %v179
    %v383 = vunpack.c.l.b16 %v180
    %v384 = vunpack.c.l.b16 %v181
    %v385 = vunpack.c.l.b16 %v182
    %v386 = vunpack.c.l.b16 %v183
    %v387 = vunpack.c.l.b16 %v184
    %v388 = vpack.c.b16 %v291, %v290
    %v389 = vpack.c.b16 %v293, %v292
    %v390 = vpack.c.b16 %v295, %v294
    %v391 = vpack.c.b16 %v297, %v296
    %v392 = vpack.c.b16 %v299, %v298
    %v393 = vpack.c.b16 %v301, %v300
    %v394 = vpack.c.b16 %v303, %v302
    %v395 = vpack.c.b16 %v305, %v304
    %v396 = vpack.c.b16 %v307, %v306
    %v397 = vpack.c.b16 %v309, %v308
    %v398 = vpack.c.b16 %v311, %v310
    %v399 = vpack.c.b16 %v313, %v312
    %v400 = vpack.c.b16 %v315, %v314
    %v401 = vpack.c.b16 %v317, %v316
    %v402 = vpack.c.b16 %v319, %v318
    %v403 = vpack.c.b16 %v321, %v320
    %v404 = vpack.c.b16 %v323, %v322
    %v405 = vpack.c.b16 %v325, %v324
    %v406 = vpack.c.b16 %v327, %v326
    %v407 = vpack.c.b16 %v329, %v328
    %v408 = vpack.c.b16 %v331, %v330
    %v409 = vpack.c.b16 %v333, %v332
    %v410 = vpack.c.b16 %v335, %v334
    %v411 = vpack.c.b16 %v337, %v336
    %v412 = vpack.c.b16 %v339, %v338
    %v413 = vpack.c.b16 %v341, %v340
    %v414 = vpack.c.b16 %v343, %v342
    %v415 = vpack.c.b16 %v345, %v344
    %v416 = vpack.c.b16 %v347, %v346
    %v417 = vpack.c.b16 %v349, %v348
    %v418 = vpack.c.b16 %v351, %v350
    %v419 = vpack.c.b16 %v353, %v352
    %v420 = vpack.c.b16 %v355, %v354
    %v421 = vpack.c.b16 %v357, %v356
    %v422 = vpack.c.b16 %v359, %v358
    %v423 = vpack.c.b16 %v361, %v360
    %v424 = vpack.c.b16 %v363, %v362
    %v425 = vpack.c.b16 %v365, %v364
    %v426 = vpack.c.b16 %v367, %v366
    %v427 = vpack.c.b16 %v369, %v368
    %v428 = vpack.c.b16 %v371, %v370
    %v429 = vpack.c.b16 %v373, %v372
    %v430 = vpack.c.b16 %v375, %v374
    %v431 = vpack.c.b16 %v377, %v376
    %v432 = vpack.c.b16 %v379, %v378
    %v433 = vpack.c.b16 %v381, %v380
    %v434 = vpack.c.b16 %v383, %v382
    %v435 = vpack.c.b16 %v385, %v384
    %v436 = vpack.c.b16 %v387, %v386
    %vm486 = vcmask 130048
    %v488 = vsel %vm486, %v86, 0
    %490 = vmatprep.subr.bf16.mxu0 0
    %491 = vmatpush1.bf16.msra.mxu0 %v395
    %492 = vmatprep.subr.bf16.mxu0 0
    %493 = vmatpush1.bf16.msra.mxu0 %v394
    %494 = vmatprep.subr.bf16.mxu0 0
    %495 = vmatpush1.bf16.msra.mxu0 %v393
    %496 = vmatprep.subr.bf16.mxu0 0
    %497 = vmatpush1.bf16.msra.mxu0 %v392
    %498 = vmatprep.subr.bf16.mxu0 0
    %499 = vmatpush1.bf16.msra.mxu0 %v391
    %500 = vmatprep.subr.bf16.mxu0 0
    %501 = vmatpush1.bf16.msra.mxu0 %v390
    %502 = vmatprep.subr.bf16.mxu0 0
    %503 = vmatpush1.bf16.msra.mxu0 %v389
    %504 = vmatprep.subr.bf16.mxu0 0
    %505 = vmatpush1.bf16.msra.mxu0 %v388
    %506 = vmatprep.subr.bf16.mxu0 0
    %507 = vmatpush2.bf16.msra.mxu0 %v403
    %508 = vmatprep.subr.bf16.mxu0 0
    %509 = vmatpush2.bf16.msra.mxu0 %v402
    %510 = vmatprep.subr.bf16.mxu0 0
    %511 = vmatpush2.bf16.msra.mxu0 %v401
    %512 = vmatprep.subr.bf16.mxu0 0
    %513 = vmatpush2.bf16.msra.mxu0 %v400
    %514 = vmatprep.subr.bf16.mxu0 0
    %515 = vmatpush2.bf16.msra.mxu0 %v399
    %516 = vmatprep.subr.bf16.mxu0 0
    %517 = vmatpush2.bf16.msra.mxu0 %v398
    %518 = vmatprep.subr.bf16.mxu0 0
    %519 = vmatpush2.bf16.msra.mxu0 %v397
    %520 = vmatprep.subr.bf16.mxu0 0
    %521 = vmatpush2.bf16.msra.mxu0 %v396
    %522 = vmatprep.mubr.bf16.mxu0 %v81
    %523 = vmatmul.mubr.bf16.gmra.mxu0 %v80
    %v524 = vpop.f32.mrf.mxu0
    %v525 = vadd.f32 %v190, %v524
    %v526 = vpop.f32.mrf.mxu0
    %v527 = vpop.f32.mrf.mxu0
    %v528 = vpop.f32.mrf.mxu0
    %529 = vdwg.mxu0
    %530 = vmatprep.subr.bf16.mxu0 0
    %531 = vmatpush1.bf16.msra.mxu0 %v411
    %532 = vmatprep.subr.bf16.mxu0 0
    %533 = vmatpush1.bf16.msra.mxu0 %v410
    %534 = vmatprep.subr.bf16.mxu0 0
    %535 = vmatpush1.bf16.msra.mxu0 %v409
    %536 = vmatprep.subr.bf16.mxu0 0
    %537 = vmatpush1.bf16.msra.mxu0 %v408
    %538 = vmatprep.subr.bf16.mxu0 0
    %539 = vmatpush1.bf16.msra.mxu0 %v407
    %540 = vmatprep.subr.bf16.mxu0 0
    %541 = vmatpush1.bf16.msra.mxu0 %v406
    %542 = vmatprep.subr.bf16.mxu0 0
    %543 = vmatpush1.bf16.msra.mxu0 %v405
    %544 = vmatprep.subr.bf16.mxu0 0
    %545 = vmatpush1.bf16.msra.mxu0 %v404
    %546 = vmatprep.subr.bf16.mxu0 0
    %547 = vmatpush2.bf16.msra.mxu0 %v419
    %548 = vmatprep.subr.bf16.mxu0 0
    %549 = vmatpush2.bf16.msra.mxu0 %v418
    %550 = vmatprep.subr.bf16.mxu0 0
    %551 = vmatpush2.bf16.msra.mxu0 %v417
    %552 = vmatprep.subr.bf16.mxu0 0
    %553 = vmatpush2.bf16.msra.mxu0 %v416
    %554 = vmatprep.subr.bf16.mxu0 0
    %555 = vmatpush2.bf16.msra.mxu0 %v415
    %556 = vmatprep.subr.bf16.mxu0 0
    %557 = vmatpush2.bf16.msra.mxu0 %v414
    %558 = vmatprep.subr.bf16.mxu0 0
    %559 = vmatpush2.bf16.msra.mxu0 %v413
    %560 = vmatprep.subr.bf16.mxu0 0
    %561 = vmatpush2.bf16.msra.mxu0 %v412
    %562 = vmatprep.mubr.bf16.mxu0 %v83
    %563 = vmatmul.mubr.bf16.gmra.mxu0 %v82
    %v564 = vpop.f32.mrf.mxu0
    %v565 = vadd.f32 %v525, %v564
    %v566 = vpop.f32.mrf.mxu0
    %v567 = vpop.f32.mrf.mxu0
    %v568 = vpop.f32.mrf.mxu0
    %569 = vdwg.mxu0
    %570 = vmatprep.subr.bf16.mxu0 0
    %571 = vmatpush1.bf16.msra.mxu0 %v427
    %572 = vmatprep.subr.bf16.mxu0 0
    %573 = vmatpush1.bf16.msra.mxu0 %v426
    %574 = vmatprep.subr.bf16.mxu0 0
    %575 = vmatpush1.bf16.msra.mxu0 %v425
    %576 = vmatprep.subr.bf16.mxu0 0
    %577 = vmatpush1.bf16.msra.mxu0 %v424
    %578 = vmatprep.subr.bf16.mxu0 0
    %579 = vmatpush1.bf16.msra.mxu0 %v423
    %580 = vmatprep.subr.bf16.mxu0 0
    %581 = vmatpush1.bf16.msra.mxu0 %v422
    %582 = vmatprep.subr.bf16.mxu0 0
    %583 = vmatpush1.bf16.msra.mxu0 %v421
    %584 = vmatprep.subr.bf16.mxu0 0
    %585 = vmatpush1.bf16.msra.mxu0 %v420
    %586 = vmatprep.subr.bf16.mxu0 0
    %587 = vmatpush2.bf16.msra.mxu0 %v435
    %588 = vmatprep.subr.bf16.mxu0 0
    %589 = vmatpush2.bf16.msra.mxu0 %v434
    %590 = vmatprep.subr.bf16.mxu0 0
    %591 = vmatpush2.bf16.msra.mxu0 %v433
    %592 = vmatprep.subr.bf16.mxu0 0
    %593 = vmatpush2.bf16.msra.mxu0 %v432
    %594 = vmatprep.subr.bf16.mxu0 0
    %595 = vmatpush2.bf16.msra.mxu0 %v431
    %596 = vmatprep.subr.bf16.mxu0 0
    %597 = vmatpush2.bf16.msra.mxu0 %v430
    %598 = vmatprep.subr.bf16.mxu0 0
    %599 = vmatpush2.bf16.msra.mxu0 %v429
    %600 = vmatprep.subr.bf16.mxu0 0
    %601 = vmatpush2.bf16.msra.mxu0 %v428
    %602 = vmatprep.mubr.bf16.mxu0 %v85
    %603 = vmatmul.mubr.bf16.gmra.mxu0 %v84
    %v604 = vpop.f32.mrf.mxu0
    %v605 = vadd.f32 %v565, %v604
    %v606 = vpop.f32.mrf.mxu0
    %v607 = vpop.f32.mrf.mxu0
    %v608 = vpop.f32.mrf.mxu0
    %609 = vdwg.mxu0
    %610 = vmatprep.subr.bf16.mxu0 0
    %611 = vmatpush1.bf16.msra.mxu0 0
    %612 = vmatprep.subr.bf16.mxu0 0
    %613 = vmatpush1.bf16.msra.mxu0 0
    %614 = vmatprep.subr.bf16.mxu0 0
    %615 = vmatpush1.bf16.msra.mxu0 0
    %616 = vmatprep.subr.bf16.mxu0 0
    %617 = vmatpush1.bf16.msra.mxu0 0
    %618 = vmatprep.subr.bf16.mxu0 0
    %619 = vmatpush1.bf16.msra.mxu0 0
    %620 = vmatprep.subr.bf16.mxu0 0
    %621 = vmatpush1.bf16.msra.mxu0 0
    %622 = vmatprep.subr.bf16.mxu0 0
    %623 = vmatpush1.bf16.msra.mxu0 0
    %624 = vmatprep.subr.bf16.mxu0 0
    %625 = vmatpush1.bf16.msra.mxu0 %v436
    %626 = vmatprep.subr.bf16.mxu0 0
    %627 = vmatpush2.bf16.msra.mxu0 0
    %628 = vmatprep.subr.bf16.mxu0 0
    %629 = vmatpush2.bf16.msra.mxu0 0
    %630 = vmatprep.subr.bf16.mxu0 0
    %631 = vmatpush2.bf16.msra.mxu0 0
    %632 = vmatprep.subr.bf16.mxu0 0
    %633 = vmatpush2.bf16.msra.mxu0 0
    %634 = vmatprep.subr.bf16.mxu0 0
    %635 = vmatpush2.bf16.msra.mxu0 0
    %636 = vmatprep.subr.bf16.mxu0 0
    %637 = vmatpush2.bf16.msra.mxu0 0
    %638 = vmatprep.subr.bf16.mxu0 0
    %639 = vmatpush2.bf16.msra.mxu0 0
    %640 = vmatprep.subr.bf16.mxu0 0
    %641 = vmatpush2.bf16.msra.mxu0 0
    %642 = vmatprep.mubr.bf16.mxu0 0
    %643 = vmatmul.mubr.bf16.gmra.mxu0 %v488
    %v644 = vpop.f32.mrf.mxu0
    %v645 = vadd.f32 %v605, %v644
    %v646 = vpop.f32.mrf.mxu0
    %v647 = vpop.f32.mrf.mxu0
    %v648 = vpop.f32.mrf.mxu0
    %649 = vdwg.mxu0
    %v650 = vmax.f32 %v645, 0.0
    %v651 = vpack.c.bf16 %v650, %v650
    %v652 = vld [vmem:[%s3] sm:$0xf]
    %v653 = vld [vmem:[%s3 + $0x4] sm:$0xf]
    %v654 = vld [vmem:[%s3 + $0x8] sm:$0xf]
    %v655 = vld [vmem:[%s3 + $0xc] sm:$0xf]
    %v656 = vld [vmem:[%s3 + $0x10] sm:$0xf]
    %v657 = vld [vmem:[%s3 + $0x14] sm:$0xf]
    %v658 = vld [vmem:[%s3 + $0x18] sm:$0xf]
    %v659 = vld [vmem:[%s3 + $0x1c] sm:$0xf]
    %v660 = vld [vmem:[%s3 + $0x20] sm:$0xf]
    %v661 = vld [vmem:[%s3 + $0x24] sm:$0xf]
    %v662 = vld [vmem:[%s3 + $0x28] sm:$0xf]
    %v663 = vld [vmem:[%s3 + $0x2c] sm:$0xf]
    %v664 = vld [vmem:[%s3 + $0x30] sm:$0xf]
    %v665 = vld [vmem:[%s3 + $0x34] sm:$0xf]
    %v666 = vld [vmem:[%s3 + $0x38] sm:$0xf]
    %v667 = vld [vmem:[%s3 + $0x3c] sm:$0xf]
    %v668 = vld [vmem:[%s4] sm:$0x1]
    %v670 = vlaneseq
    %v671 = vshrl.u32 %v670, 7
    %v672 = vsub.s32 0, %v671
    %v673 = vrot.slane %v668, %v672
    %v691 = vunpack.c.l.b16 %v652
    %v692 = vunpack.c.l.b16 %v653
    %v693 = vunpack.c.l.b16 %v654
    %v694 = vunpack.c.l.b16 %v655
    %v695 = vunpack.c.l.b16 %v656
    %v696 = vunpack.c.l.b16 %v657
    %v697 = vunpack.c.l.b16 %v658
    %v698 = vunpack.c.l.b16 %v659
    %v699 = vunpack.c.l.b16 %v660
    %v700 = vunpack.c.l.b16 %v661
    %v701 = vunpack.c.l.b16 %v662
    %v702 = vunpack.c.l.b16 %v663
    %v703 = vunpack.c.l.b16 %v664
    %v704 = vunpack.c.l.b16 %v665
    %v705 = vunpack.c.l.b16 %v666
    %v706 = vunpack.c.l.b16 %v667
    %v707 = vpack.c.b16 %v692, %v691
    %v708 = vpack.c.b16 %v694, %v693
    %v709 = vpack.c.b16 %v696, %v695
    %v710 = vpack.c.b16 %v698, %v697
    %v711 = vpack.c.b16 %v700, %v699
    %v712 = vpack.c.b16 %v702, %v701
    %v713 = vpack.c.b16 %v704, %v703
    %v714 = vpack.c.b16 %v706, %v705
    %723 = vmatprep.subr.bf16.mxu0 0
    %724 = vmatpush1.bf16.msra.mxu0 %v714
    %725 = vmatprep.subr.bf16.mxu0 0
    %726 = vmatpush1.bf16.msra.mxu0 %v713
    %727 = vmatprep.subr.bf16.mxu0 0
    %728 = vmatpush1.bf16.msra.mxu0 %v712
    %729 = vmatprep.subr.bf16.mxu0 0
    %730 = vmatpush1.bf16.msra.mxu0 %v711
    %731 = vmatprep.subr.bf16.mxu0 0
    %732 = vmatpush1.bf16.msra.mxu0 %v710
    %733 = vmatprep.subr.bf16.mxu0 0
    %734 = vmatpush1.bf16.msra.mxu0 %v709
    %735 = vmatprep.subr.bf16.mxu0 0
    %736 = vmatpush1.bf16.msra.mxu0 %v708
    %737 = vmatprep.subr.bf16.mxu0 0
    %738 = vmatpush1.bf16.msra.mxu0 %v707
    %739 = vmatprep.subr.bf16.mxu0 0
    %740 = vmatpush2.bf16.msra.mxu0 0
    %741 = vmatprep.subr.bf16.mxu0 0
    %742 = vmatpush2.bf16.msra.mxu0 0
    %743 = vmatprep.subr.bf16.mxu0 0
    %744 = vmatpush2.bf16.msra.mxu0 0
    %745 = vmatprep.subr.bf16.mxu0 0
    %746 = vmatpush2.bf16.msra.mxu0 0
    %747 = vmatprep.subr.bf16.mxu0 0
    %748 = vmatpush2.bf16.msra.mxu0 0
    %749 = vmatprep.subr.bf16.mxu0 0
    %750 = vmatpush2.bf16.msra.mxu0 0
    %751 = vmatprep.subr.bf16.mxu0 0
    %752 = vmatpush2.bf16.msra.mxu0 0
    %753 = vmatprep.subr.bf16.mxu0 0
    %754 = vmatpush2.bf16.msra.mxu0 0
    %755 = vmatprep.mubr.bf16.mxu0 0
    %756 = vmatmul.mubr.bf16.gmra.mxu0 %v651
    %v757 = vpop.f32.mrf.mxu0
    %v758 = vadd.f32 %v673, %v757
    %v759 = vpop.f32.mrf.mxu0
    %v760 = vpop.f32.mrf.mxu0
    %v761 = vpop.f32.mrf.mxu0
    %762 = vdwg.mxu0
    %763 = vst [vmem:[#allocation5] sm:$0x3] %v758
    // Predicated region
    $region26: #{base_model_forward.1} parent=1 // pred_check
      _
    $region27: #{base_model_forward.1} parent=1 // pred_check_branch
      %765 = sbr.rel (0) target = $region29
    $region28: #{base_model_forward.1} parent=1 // pred_region
      %s767 = ssub.s32 32, 32
      %768 = vsyncadd [#allocation4], %s767
      %s770 = sshll.u32 [#allocation5], 4
      %s771 = int_to_ptr.vmem [resolvable:$true] %s770
      %773 = dma.vmem_to_hbm [thread:$0]  %s771, 32, %s5, [#allocation4]
    $region29: #{base_model_forward.1} parent=1 // pred_fallthru
      _
    // Predicated region
    $region30: #{base_model_forward.1} parent=1 // pred_check
      _
    $region31: #{base_model_forward.1} parent=1 // pred_check_branch
      %775 = sbr.rel (0) target = $region33
    $region32: #{base_model_forward.1} parent=1 // pred_region
      %776 = dma.done [#allocation4], 32
    $region33: #{base_model_forward.1} parent=1 // pred_fallthru
      _
    %777 = vsyncpa [#allocation3], 1
    %778 = vsyncpa [#allocation4], 1

</llo_original>
